<compile_context>
chip_gen: v7x
topology: tpu7x:2x2x1
jax: 0.10.0
libtpu: 0.0.40
codegen_flags: <defaults>
</compile_context>

<pallas_src>
import functools

import jax
import jax.numpy as jnp
from jax import lax
from jax.experimental import pallas as pl
from jax.experimental.pallas import tpu as pltpu

LANES = 128            # lane-dense width (one full vreg lane dim)
MAX_TILE_ROWS = 4096   # 4096 * 128 * 4 B = 2 MiB per input tile


def _round_up(x, m):
    return ((x + m - 1) // m) * m


def _mse_loss_kernel(pred_ref, tgt_ref, mask_ref, num_ref, den_ref, *,
                     tile_rows, valid_rows, ragged):
    # pred/tgt/mask refs: (tile_rows, LANES); num/den refs: (1, 8, LANES) per-block partials.
    pred = pred_ref[...].astype(jnp.float32)
    tgt = tgt_ref[...].astype(jnp.float32)
    m = mask_ref[...].astype(jnp.float32)

    res = pred - tgt

    if ragged:
        # Last block overhangs the array; the out-of-bounds rows are undefined, so
        # zero them via select (multiplying by a mask would still propagate NaNs).
        base = pl.program_id(0) * tile_rows
        row_ids = lax.broadcasted_iota(jnp.int32, (tile_rows, LANES), 0)
        valid = (base + row_ids) < valid_rows
        m = jnp.where(valid, m, 0.0)
        res = jnp.where(valid, res, 0.0)

    sq = m * res * res

    # Layout-preserving reshape (rows group naturally in sublane-sized chunks of 8),
    # then a pure-VPU accumulation down to a single (8, LANES) vreg per quantity.
    num_ref[0] = jnp.sum(sq.reshape(tile_rows // 8, 8, LANES), axis=0)
    den_ref[0] = jnp.sum(m.reshape(tile_rows // 8, 8, LANES), axis=0)


def mse_loss_pallas(prediction, target, mask, *, max_tile_rows=MAX_TILE_ROWS):
    """Batch-based masked MSE loss. prediction/target/mask: (B, H, W)."""
    B, H, W = prediction.shape
    total = B * H * W

    if mask.dtype == jnp.bool_:
        mask = mask.astype(jnp.float32)

    # Lane-dense flattening: (B, H, W) -> (rows_padded, LANES). Only pad when the
    # total is not already a multiple of 8*LANES (pad region has mask == 0 so it
    # contributes nothing); for aligned shapes this is a free reshape.
    rows = pl.cdiv(total, LANES)
    rows_padded = _round_up(rows, 8)
    padded_total = rows_padded * LANES

    def _prep(x):
        flat = x.reshape(-1)
        if padded_total != total:
            flat = jnp.pad(flat, (0, padded_total - total))
        return flat.reshape(rows_padded, LANES)

    p2 = _prep(prediction)
    t2 = _prep(target)
    m2 = _prep(mask)

    tile_rows = min(_round_up(max_tile_rows, 8), rows_padded)
    n_blocks = pl.cdiv(rows_padded, tile_rows)
    ragged = (rows_padded % tile_rows) != 0  # static: last block overhangs the array

    kernel = functools.partial(
        _mse_loss_kernel,
        tile_rows=tile_rows,
        valid_rows=rows_padded,
        ragged=ragged,
    )

    in_spec = pl.BlockSpec((tile_rows, LANES), lambda i: (i, 0))
    out_spec = pl.BlockSpec((1, 8, LANES), lambda i: (i, 0, 0))

    num_p, den_p = pl.pallas_call(
        kernel,
        out_shape=(
            jax.ShapeDtypeStruct((n_blocks, 8, LANES), jnp.float32),
            jax.ShapeDtypeStruct((n_blocks, 8, LANES), jnp.float32),
        ),
        grid_spec=pltpu.PrefetchScalarGridSpec(
            num_scalar_prefetch=0,
            grid=(n_blocks,),
            in_specs=[in_spec, in_spec, in_spec],
            out_specs=[out_spec, out_spec],
        ),
        compiler_params=pltpu.CompilerParams(
            # Per-block independent partial outputs -> grid axis is truly parallel
            # (lets Mosaic shard blocks across v7x's two TensorCores).
            dimension_semantics=("parallel",),
            # 3 inputs x 2 pipeline buffers x 2 MiB tiles = 12 MiB; leave headroom
            # above v5e's 16 MiB default scoped limit, stay within v7x's 64 MiB VMEM.
            vmem_limit_bytes=32 * 1024 * 1024,
        ),
    )(p2, t2, m2)

    image_loss_sum = jnp.sum(num_p)   # == sum_b image_loss[b]
    divisor = 2.0 * jnp.sum(den_p)    # == sum_b 2 * M[b]
    # PyTorch: `return 0` if divisor == 0, else sum(image_loss) / divisor
    return jnp.where(divisor == 0.0, jnp.float32(0.0), image_loss_sum / divisor)


class MSELoss:
    """Mirror of the PyTorch module (only 'batch-based' reduction supported here)."""

    def __init__(self, reduction="batch-based"):
        if reduction != "batch-based":
            # TODO(synk): image-based reduction (per-image divide + mean) not implemented.
            raise NotImplementedError("only 'batch-based' reduction is implemented")

    def __call__(self, prediction, target, mask):
        return mse_loss_pallas(prediction, target, mask)


def _mse_loss_ref(prediction, target, mask):
    prediction = prediction.astype(jnp.float32)
    target = target.astype(jnp.float32)
    mask = mask.astype(jnp.float32)
    M = jnp.sum(mask, axis=(1, 2))
    res = prediction - target
    image_loss = jnp.sum(mask * res * res, axis=(1, 2))
    divisor = jnp.sum(2.0 * M)
    return jnp.where(divisor == 0.0, 0.0, jnp.sum(image_loss) / divisor)


if __name__ == "__main__":
    key = jax.random.PRNGKey(0)
    loss_fn = MSELoss(reduction="batch-based")

    k1, k2, k3, k4, k5, k6, k7, k8, k9 = jax.random.split(key, 9)

    # Case 1: the module's canonical small shape (aligned -> reshape-only path).
    B, H, W = 2, 16, 16
    prediction = jax.random.normal(k1, (B, H, W), dtype=jnp.float32)
    target = jax.random.normal(k2, (B, H, W), dtype=jnp.float32)
    mask = (jax.random.uniform(k3, (B, H, W)) > 0.3).astype(jnp.float32)

    out = jax.block_until_ready(loss_fn(prediction, target, mask))
    ref = _mse_loss_ref(prediction, target, mask)
    assert jnp.allclose(out, ref, rtol=1e-5, atol=1e-6), (out, ref)

    # Case 2: odd shape exercising lane/sublane padding.
    B2, H2, W2 = 3, 17, 23
    p2 = jax.random.normal(k4, (B2, H2, W2), dtype=jnp.float32)
    t2 = jax.random.normal(k5, (B2, H2, W2), dtype=jnp.float32)
    m2 = (jax.random.uniform(k6, (B2, H2, W2)) > 0.5).astype(jnp.float32)

    out2 = jax.block_until_ready(loss_fn(p2, t2, m2))
    ref2 = _mse_loss_ref(p2, t2, m2)
    assert jnp.allclose(out2, ref2, rtol=1e-5, atol=1e-6), (out2, ref2)

    # Case 3: all-zero mask -> divisor == 0 guard.
    out3 = jax.block_until_ready(loss_fn(prediction, target, jnp.zeros_like(mask)))
    assert jnp.allclose(out3, 0.0), out3

    # Case 4: multi-block grid with a ragged last block (small tile to exercise the
    # in-kernel row-masking path without large arrays).
    B4, H4, W4 = 4, 48, 64   # 12288 elems -> 96 rows; tile 64 -> blocks of 64 + 32
    p4 = jax.random.normal(k7, (B4, H4, W4), dtype=jnp.float32)
    t4 = jax.random.normal(k8, (B4, H4, W4), dtype=jnp.float32)
    m4 = (jax.random.uniform(k9, (B4, H4, W4)) > 0.4).astype(jnp.float32)

    out4 = jax.block_until_ready(mse_loss_pallas(p4, t4, m4, max_tile_rows=64))
    ref4 = _mse_loss_ref(p4, t4, m4)
    assert jnp.allclose(out4, ref4, rtol=1e-5, atol=1e-6), (out4, ref4)

    print("KERNEL_OK")
</pallas_src>

<mosaic_0001>
module attributes {stable_mosaic.version = 11 : i64} {
  func.func @_mse_loss_kernel(%arg0: i32, %arg1: memref<8x128xf32, #tpu.memory_space<vmem>>, %arg2: memref<8x128xf32, #tpu.memory_space<vmem>>, %arg3: memref<8x128xf32, #tpu.memory_space<vmem>>, %arg4: memref<1x8x128xf32, #tpu.memory_space<vmem>>, %arg5: memref<1x8x128xf32, #tpu.memory_space<vmem>>) attributes {dimension_semantics = [#tpu.dimension_semantics<parallel>], iteration_bounds = array<i64: 1>, scalar_prefetch = 0 : i64, scratch_operands = 0 : i64, tpu.core_type = #tpu.core_type<tc>, window_params = [{transform_indices = @transform_0, window_bounds = array<i64: 8, 128>}, {transform_indices = @transform_1, window_bounds = array<i64: 8, 128>}, {transform_indices = @transform_2, window_bounds = array<i64: 8, 128>}, {transform_indices = @transform_3, window_bounds = array<i64: 1, 8, 128>}, {transform_indices = @transform_4, window_bounds = array<i64: 1, 8, 128>}]} {
    %c0 = arith.constant 0 : index
    %c0_0 = arith.constant 0 : index
    %0 = vector.load %arg1[%c0, %c0_0] : memref<8x128xf32, #tpu.memory_space<vmem>>, vector<8x128xf32>
    %c0_1 = arith.constant 0 : index
    %c0_2 = arith.constant 0 : index
    %1 = vector.load %arg2[%c0_1, %c0_2] : memref<8x128xf32, #tpu.memory_space<vmem>>, vector<8x128xf32>
    %c0_3 = arith.constant 0 : index
    %c0_4 = arith.constant 0 : index
    %2 = vector.load %arg3[%c0_3, %c0_4] : memref<8x128xf32, #tpu.memory_space<vmem>>, vector<8x128xf32>
    %3 = arith.subf %0, %1 : vector<8x128xf32>
    %4 = arith.mulf %2, %3 : vector<8x128xf32>
    %5 = arith.mulf %4, %3 : vector<8x128xf32>
    %6 = vector.shape_cast %5 : vector<8x128xf32> to vector<1x8x128xf32>
    %cst = arith.constant dense<0.000000e+00> : vector<8x128xf32>
    %7 = vector.multi_reduction <add>, %6, %cst [0] : vector<1x8x128xf32> to vector<8x128xf32>
    %c0_5 = arith.constant 0 : index
    %c0_6 = arith.constant 0 : index
    %c0_7 = arith.constant 0 : index
    %8 = vector.load %arg4[%c0_5, %c0_6, %c0_7] : memref<1x8x128xf32, #tpu.memory_space<vmem>>, vector<1x8x128xf32>
    %9 = vector.shape_cast %8 : vector<1x8x128xf32> to vector<8x128xf32>
    %10 = vector.shape_cast %7 : vector<8x128xf32> to vector<1x8x128xf32>
    tpu.vector_store %arg4[%c0_5, %c0_6, %c0_7], %10 {strides = array<i32>} : memref<1x8x128xf32, #tpu.memory_space<vmem>>, vector<1x8x128xf32>,
    %11 = vector.shape_cast %2 : vector<8x128xf32> to vector<1x8x128xf32>
    %cst_8 = arith.constant dense<0.000000e+00> : vector<8x128xf32>
    %12 = vector.multi_reduction <add>, %11, %cst_8 [0] : vector<1x8x128xf32> to vector<8x128xf32>
    %c0_9 = arith.constant 0 : index
    %c0_10 = arith.constant 0 : index
    %c0_11 = arith.constant 0 : index
    %13 = vector.load %arg5[%c0_9, %c0_10, %c0_11] : memref<1x8x128xf32, #tpu.memory_space<vmem>>, vector<1x8x128xf32>
    %14 = vector.shape_cast %13 : vector<1x8x128xf32> to vector<8x128xf32>
    %15 = vector.shape_cast %12 : vector<8x128xf32> to vector<1x8x128xf32>
    tpu.vector_store %arg5[%c0_9, %c0_10, %c0_11], %15 {strides = array<i32>} : memref<1x8x128xf32, #tpu.memory_space<vmem>>, vector<1x8x128xf32>,
    return
  }
  func.func @transform_0(%arg0: i32) -> (i32, i32) {
    %c0_i32 = arith.constant 0 : i32
    %c0_i32_0 = arith.constant 0 : i32
    return %arg0, %c0_i32 : i32, i32
  }
  func.func @transform_1(%arg0: i32) -> (i32, i32) {
    %c0_i32 = arith.constant 0 : i32
    %c0_i32_0 = arith.constant 0 : i32
    return %arg0, %c0_i32 : i32, i32
  }
  func.func @transform_2(%arg0: i32) -> (i32, i32) {
    %c0_i32 = arith.constant 0 : i32
    %c0_i32_0 = arith.constant 0 : i32
    return %arg0, %c0_i32 : i32, i32
  }
  func.func @transform_3(%arg0: i32) -> (i32, i32, i32) {
    %c0_i32 = arith.constant 0 : i32
    %c0_i32_0 = arith.constant 0 : i32
    %c0_i32_1 = arith.constant 0 : i32
    return %arg0, %c0_i32, %c0_i32_0 : i32, i32, i32
  }
  func.func @transform_4(%arg0: i32) -> (i32, i32, i32) {
    %c0_i32 = arith.constant 0 : i32
    %c0_i32_0 = arith.constant 0 : i32
    %c0_i32_1 = arith.constant 0 : i32
    return %arg0, %c0_i32, %c0_i32_0 : i32, i32, i32
  }
}

</mosaic_0001>

<llo_original>
// kernel: tpu_custom_call.1
$region0: #{tpu_custom_call.1}
  #allocation0 [shape = 'u32[]', space=smem, size = 0x4, offset = 0x4, fixed_abs, tag = 'smem constant byte address 0x4 - core index']
  #allocation1 [shape = 'u32[144,128]{1,0:T(1,128)}', space=vmem, size = 0x12000, scoped, tag = 'internal scratch']
  %s0 = inlined_call_operand.hbm [shape: f32[8,128], index: 0, kind: input, shape index: {}]
  %s1 = inlined_call_operand.hbm [shape: f32[8,128], index: 1, kind: input, shape index: {}]
  %s2 = inlined_call_operand.hbm [shape: f32[8,128], index: 2, kind: input, shape index: {}]
  %s3 = inlined_call_operand.hbm [shape: f32[1,8,128], index: 3, kind: output, shape index: {0}]
  %s4 = inlined_call_operand.hbm [shape: f32[1,8,128], index: 4, kind: output, shape index: {1}]
  %5 = xla_tuple %s3, %s4
  %s6 = sld [smem:[#allocation0]]
  $region42: #{tpu_custom_call.1} parent=0
    _
  %s8 = ssub.s32 1, %s6
  %s9 = scalar_select 0, %s8, %s6
  $region1: #{tpu_custom_call.1} parent=0
    #allocation2 [shape = 'u8[4096]{0}', space=vmem, size = 0x1000, scoped, tag = 'input window, operand 0, single buffered']
    #allocation3 [shape = 's32[1]{0}', space=sflag, size = 0x4, scoped, tag = 'scoped memory for tpu_custom_call.1']
    #allocation4 [shape = 's32[1]{0}', space=sflag, size = 0x4, scoped, tag = 'scoped memory for tpu_custom_call.1']
    #allocation5 [shape = 'u8[4096]{0}', space=vmem, size = 0x1000, scoped, tag = 'input window, operand 1, single buffered']
    #allocation6 [shape = 's32[1]{0}', space=sflag, size = 0x4, scoped, tag = 'scoped memory for tpu_custom_call.1']
    #allocation7 [shape = 'u8[4096]{0}', space=vmem, size = 0x1000, scoped, tag = 'input window, operand 2, single buffered']
    #allocation8 [shape = 'u8[4096]{0}', space=vmem, size = 0x1000, scoped, tag = 'output window, operand 0, single buffered']
    #allocation9 [shape = 'u8[4096]{0}', space=vmem, size = 0x1000, scoped, tag = 'output window, operand 1, single buffered']
    #allocation10 [shape = 's32[1]{0}', space=sflag, size = 0x4, scoped, tag = 'scoped memory for tpu_custom_call.1']
    %10 = vsyncpa [#allocation3], 0
    %11 = vsyncpa [#allocation6], 0
    %12 = vsyncpa [#allocation4], 0
    %13 = vsyncpa [#allocation10], 0
    // Predicated region
    $region2: #{tpu_custom_call.1} parent=1 // pred_check
      _
    $region3: #{tpu_custom_call.1} parent=1 // pred_check_branch
      %15 = sbr.rel (0) target = $region5
    $region4: #{tpu_custom_call.1} parent=1 // pred_region
      %s17 = ssub.s32 128, 128
      %18 = vsyncadd [#allocation3], %s17
      %s20 = sshll.u32 [#allocation2], 4
      %s21 = int_to_ptr.vmem [resolvable:$true] %s20
      %23 = dma.hbm_to_vmem [thread:$0]  %s0, 128, %s21, [#allocation3]
    $region5: #{tpu_custom_call.1} parent=1 // pred_fallthru
      _
    // Predicated region
    $region6: #{tpu_custom_call.1} parent=1 // pred_check
      _
    $region7: #{tpu_custom_call.1} parent=1 // pred_check_branch
      %25 = sbr.rel (0) target = $region9
    $region8: #{tpu_custom_call.1} parent=1 // pred_region
      %s27 = ssub.s32 128, 128
      %28 = vsyncadd [#allocation6], %s27
      %s30 = sshll.u32 [#allocation5], 4
      %s31 = int_to_ptr.vmem [resolvable:$true] %s30
      %33 = dma.hbm_to_vmem [thread:$0]  %s1, 128, %s31, [#allocation6]
    $region9: #{tpu_custom_call.1} parent=1 // pred_fallthru
      _
    // Predicated region
    $region10: #{tpu_custom_call.1} parent=1 // pred_check
      _
    $region11: #{tpu_custom_call.1} parent=1 // pred_check_branch
      %35 = sbr.rel (0) target = $region13
    $region12: #{tpu_custom_call.1} parent=1 // pred_region
      %s37 = ssub.s32 128, 128
      %38 = vsyncadd [#allocation6], %s37
      %s40 = sshll.u32 [#allocation7], 4
      %s41 = int_to_ptr.vmem [resolvable:$true] %s40
      %43 = dma.hbm_to_vmem [thread:$0]  %s2, 128, %s41, [#allocation6]
    $region13: #{tpu_custom_call.1} parent=1 // pred_fallthru
      _
    // Predicated region
    $region14: #{tpu_custom_call.1} parent=1 // pred_check
      _
    $region15: #{tpu_custom_call.1} parent=1 // pred_check_branch
      %45 = sbr.rel (0) target = $region17
    $region16: #{tpu_custom_call.1} parent=1 // pred_region
      %46 = dma.done [#allocation3], 128
    $region17: #{tpu_custom_call.1} parent=1 // pred_fallthru
      _
    // Predicated region
    $region18: #{tpu_custom_call.1} parent=1 // pred_check
      _
    $region19: #{tpu_custom_call.1} parent=1 // pred_check_branch
      %48 = sbr.rel (0) target = $region21
    $region20: #{tpu_custom_call.1} parent=1 // pred_region
      %49 = dma.done [#allocation6], 128
    $region21: #{tpu_custom_call.1} parent=1 // pred_fallthru
      _
    // Predicated region
    $region22: #{tpu_custom_call.1} parent=1 // pred_check
      _
    $region23: #{tpu_custom_call.1} parent=1 // pred_check_branch
      %51 = sbr.rel (0) target = $region25
    $region24: #{tpu_custom_call.1} parent=1 // pred_region
      %52 = dma.done [#allocation6], 128
    $region25: #{tpu_custom_call.1} parent=1 // pred_fallthru
      _
    %v53 = vld [vmem:[#allocation2] sm:$0xff]
    %v54 = vld [vmem:[#allocation5] sm:$0xff]
    %v55 = vld [vmem:[#allocation7] sm:$0xff]
    %v56 = vsub.f32 %v53, %v54
    %v57 = vmul.f32 %v55, %v56
    %v58 = vmul.f32 %v57, %v56
    %v59 = vadd.f32 %v58, 0.0
    %60 = vst [vmem:[#allocation8] sm:$0xff] %v59
    %v61 = vadd.f32 %v55, 0.0
    %62 = vst [vmem:[#allocation9] sm:$0xff] %v61
    // Predicated region
    $region26: #{tpu_custom_call.1} parent=1 // pred_check
      _
    $region27: #{tpu_custom_call.1} parent=1 // pred_check_branch
      %64 = sbr.rel (0) target = $region29
    $region28: #{tpu_custom_call.1} parent=1 // pred_region
      %s66 = ssub.s32 128, 128
      %67 = vsyncadd [#allocation4], %s66
      %s69 = sshll.u32 [#allocation8], 4
      %s70 = int_to_ptr.vmem [resolvable:$true] %s69
      %72 = dma.vmem_to_hbm [thread:$0]  %s70, 128, %s3, [#allocation4]
    $region29: #{tpu_custom_call.1} parent=1 // pred_fallthru
      _
    // Predicated region
    $region30: #{tpu_custom_call.1} parent=1 // pred_check
      _
    $region31: #{tpu_custom_call.1} parent=1 // pred_check_branch
      %74 = sbr.rel (0) target = $region33
    $region32: #{tpu_custom_call.1} parent=1 // pred_region
      %s76 = ssub.s32 128, 128
      %77 = vsyncadd [#allocation10], %s76
      %s79 = sshll.u32 [#allocation9], 4
      %s80 = int_to_ptr.vmem [resolvable:$true] %s79
      %82 = dma.vmem_to_hbm [thread:$0]  %s80, 128, %s4, [#allocation10]
    $region33: #{tpu_custom_call.1} parent=1 // pred_fallthru
      _
    // Predicated region
    $region34: #{tpu_custom_call.1} parent=1 // pred_check
      _
    $region35: #{tpu_custom_call.1} parent=1 // pred_check_branch
      %84 = sbr.rel (0) target = $region37
    $region36: #{tpu_custom_call.1} parent=1 // pred_region
      %85 = dma.done [#allocation4], 128
    $region37: #{tpu_custom_call.1} parent=1 // pred_fallthru
      _
    // Predicated region
    $region38: #{tpu_custom_call.1} parent=1 // pred_check
      _
    $region39: #{tpu_custom_call.1} parent=1 // pred_check_branch
      %87 = sbr.rel (0) target = $region41
    $region40: #{tpu_custom_call.1} parent=1 // pred_region
      %88 = dma.done [#allocation10], 128
    $region41: #{tpu_custom_call.1} parent=1 // pred_fallthru
      _
    %89 = vsyncpa [#allocation3], 1
    %90 = vsyncpa [#allocation6], 1
    %91 = vsyncpa [#allocation4], 1
    %92 = vsyncpa [#allocation10], 1

</llo_original>
